<compile_context>
chip_gen: v5e
topology: v5e:2x2
jax: 0.10.0
libtpu: 0.0.40
codegen_flags: <defaults>
</compile_context>

<pallas_src>
import jax
import jax.numpy as jnp
from jax import lax
from jax.experimental import pallas as pl
from jax.experimental.pallas import tpu as pltpu


def _round_up(x, m):
    return (x + m - 1) // m * m


def _pick_tile_v(V, requested):
    """Largest multiple-of-128 divisor of V that is <= requested, else V."""
    if V <= requested or V % 128 != 0:
        return V
    t = max(128, (min(requested, V) // 128) * 128)
    while t > 128 and V % t != 0:
        t -= 128
    return t if V % t == 0 else V


def cbow_forward(inputs, emb, w1, b1, w2, b2, *,
                 block_b=256, tile_v=2048, batch_chunks=None,
                 out_dtype=jnp.float32):
    """CBOW forward pass (log-probs) as one Pallas TPU kernel."""
    B, C = inputs.shape
    V, E = emb.shape
    H = w1.shape[1]
    assert w2.shape[0] == H and w2.shape[1] == V

    # Fold the embedding table into linear1 (exact: bias/ReLU come after the
    # context sum):  (sum_c emb[idx_c]) @ W1 == sum_c (emb @ W1)[idx_c].
    # Weight-only transform; in real use cache it instead of recomputing.
    w_eff = jnp.dot(emb.astype(jnp.float32), w1.astype(jnp.float32),
                    preferred_element_type=jnp.float32,
                    precision=jax.lax.Precision.HIGHEST)       # (V, H) f32
    w2_bf = w2.astype(jnp.bfloat16)                            # MXU operand
    b1 = jnp.asarray(b1, jnp.float32).reshape(1, H)
    b2 = jnp.asarray(b2, jnp.float32).reshape(1, V)

    # ---- tiling -------------------------------------------------------------
    block_b = _round_up(min(block_b, _round_up(B, 8)), 8)
    B_pad = _round_up(B, block_b)
    n_b = B_pad // block_b
    tile_v = _pick_tile_v(V, tile_v)
    n_v = V // tile_v
    if batch_chunks is None:
        batch_chunks = 2 if (n_b >= 2 and n_b % 2 == 0) else 1
    assert n_b % batch_chunks == 0
    n_bi = n_b // batch_chunks

    idx = inputs.astype(jnp.int32)
    if B_pad != B:
        idx = jnp.pad(idx, ((0, B_pad - B), (0, 0)))   # padded rows gather tok 0
    idx_flat = idx.reshape(-1)                         # 1-D => compact SMEM pad

    grid = (batch_chunks, 2, n_v, n_bi)                # (chunk, phase, vocab, block)

    # ---- kernel (closes over static C, H, n_bi, block_b) --------------------
    def kernel(idx_ref, weff_ref, b1_ref, w2_ref, b2_ref, out_ref,
               h_ref, m_ref, l_ref):
        bo = pl.program_id(0)
        p = pl.program_id(1)    # 0 = streaming max/sum-exp, 1 = write output
        v = pl.program_id(2)
        bi = pl.program_id(3)

        row0 = pl.multiple_of((bo * n_bi + bi) * block_b, 8)
        rows = pl.ds(row0, block_b)

        # -- phase 0, first vocab tile: init stats + gather hidden ------------
        @pl.when(jnp.logical_and(p == 0, v == 0))
        def _():
            m_ref[rows, :] = jnp.full((block_b, 1), -jnp.inf, jnp.float32)
            l_ref[rows, :] = jnp.zeros((block_b, 1), jnp.float32)
            bias1 = b1_ref[...]                                  # (1, H) f32

            def gather_row(r, carry):
                base = (row0 + r) * C
                acc = weff_ref[pl.ds(idx_ref[base], 1), :]       # (1, H) f32
                for c in range(1, C):                            # small static unroll
                    acc = acc + weff_ref[pl.ds(idx_ref[base + c], 1), :]
                h_ref[pl.ds(row0 + r, 1), :] = jnp.maximum(acc + bias1, 0.0)
                return carry

            lax.fori_loop(0, block_b, gather_row, 0)

        # -- logits for this (batch block, vocab tile), both phases -----------
        h_blk = h_ref[rows, :].astype(jnp.bfloat16)              # (block_b, H)
        logits = jnp.dot(h_blk, w2_ref[...],
                         preferred_element_type=jnp.float32) + b2_ref[...]

        # -- phase 0: streaming max / sum-exp ----------------------------------
        @pl.when(p == 0)
        def _():
            m_prev = m_ref[rows, :]
            m_new = jnp.maximum(m_prev, jnp.max(logits, axis=-1, keepdims=True))
            l_ref[rows, :] = (l_ref[rows, :] * jnp.exp(m_prev - m_new)
                              + jnp.sum(jnp.exp(logits - m_new), axis=-1,
                                        keepdims=True))
            m_ref[rows, :] = m_new

        # -- phase 1, first vocab tile: m <- logsumexp -------------------------
        @pl.when(jnp.logical_and(p == 1, v == 0))
        def _():
            m_ref[rows, :] = m_ref[rows, :] + jnp.log(l_ref[rows, :])

        # -- phase 1: write normalized log-probs -------------------------------
        @pl.when(p == 1)
        def _():
            out_ref[...] = (logits - m_ref[rows, :]).astype(out_ref.dtype)

    # ---- specs ---------------------------------------------------------------
    def _const00(bo, p, v, bi, idx):
        return (0, 0)

    in_specs = [
        pl.BlockSpec((V, H), _const00),                          # W_eff resident
        pl.BlockSpec((1, H), _const00),                          # b1 resident
        # W2/b2: one vocab tile, constant across the inner batch axis, so each
        # tile is streamed only twice per batch chunk (stats + write pass).
        pl.BlockSpec((H, tile_v), lambda bo, p, v, bi, idx: (0, v)),
        pl.BlockSpec((1, tile_v), lambda bo, p, v, bi, idx: (0, v)),
    ]
    # Output only advances in phase 1; in phase 0 it stays pinned on the block
    # this chunk writes first in phase 1 -> no garbage writebacks at the
    # phase boundary, and blocks never cross batch chunks (megacore-safe).
    out_specs = pl.BlockSpec(
        (block_b, tile_v),
        lambda bo, p, v, bi, idx: (bo * n_bi + jnp.where(p == 1, bi, 0),
                                   jnp.where(p == 1, v, 0)))

    scratch_shapes = [
        pltpu.VMEM((B_pad, H), jnp.float32),   # hidden (persistent, all blocks)
        pltpu.VMEM((B_pad, 1), jnp.float32),   # running max -> logsumexp
        pltpu.VMEM((B_pad, 1), jnp.float32),   # running sum of exp
    ]

    # Rough working set; raise the scoped VMEM limit just enough (keeps well
    # under v7x's 64 MiB physical at the default block_b=256, tile_v=2048).
    vmem_need = (V * H * 4
                 + 2 * (H * tile_v * 2 + tile_v * 4)             # W2 + b2 (2-buf)
                 + 2 * (block_b * tile_v * 4)                    # out tile (2-buf)
                 + B_pad * H * 4 + 2 * B_pad * 512               # scratch (padded)
                 + (2 << 20))                                    # slack
    vmem_limit = int(min(max(2 * vmem_need, 32 * 1024 * 1024),
                         96 * 1024 * 1024))

    cost = pl.CostEstimate(
        flops=int(2 * 2 * B_pad * H * V + 2 * B_pad * C * H),
        transcendentals=int(B_pad * V + B_pad),
        bytes_accessed=int(B_pad * C * 4 + V * H * 4
                           + batch_chunks * 2 * H * V * 2
                           + batch_chunks * 2 * V * 4
                           + B_pad * V * jnp.dtype(out_dtype).itemsize),
    )

    out = pl.pallas_call(
        kernel,
        out_shape=jax.ShapeDtypeStruct((B_pad, V), out_dtype),
        grid_spec=pltpu.PrefetchScalarGridSpec(
            num_scalar_prefetch=1,
            grid=grid,
            in_specs=in_specs,
            out_specs=out_specs,
            scratch_shapes=scratch_shapes),
        compiler_params=pltpu.CompilerParams(
            dimension_semantics=("parallel", "arbitrary", "arbitrary",
                                 "arbitrary"),
            vmem_limit_bytes=vmem_limit),
        cost_estimate=cost,
    )(idx_flat, w_eff, b1, w2_bf, b2)
    return out[:B]


def cbow_reference(inputs, emb, w1, b1, w2, b2):
    embeds = jnp.take(emb, inputs, axis=0)             # (B, C, E)
    embeds_sum = jnp.sum(embeds, axis=1)               # (B, E)
    h = jnp.maximum(embeds_sum @ w1 + b1.reshape(1, -1), 0.0)
    logits = h @ w2 + b2.reshape(1, -1)
    return jax.nn.log_softmax(logits, axis=1)


if __name__ == "__main__":
    key = jax.random.PRNGKey(0)

    def make_problem(k, B, C, V, E):
        k_idx, k_emb, k_w1, k_b1, k_w2, k_b2 = jax.random.split(k, 6)
        inputs = jax.random.randint(k_idx, (B, C), 0, V, dtype=jnp.int32)
        emb = jax.random.normal(k_emb, (V, E), jnp.float32) * 0.1
        w1 = jax.random.normal(k_w1, (E, 128), jnp.float32) * 0.1
        b1 = jax.random.normal(k_b1, (1, 128), jnp.float32) * 0.1
        w2 = jax.random.normal(k_w2, (128, V), jnp.float32) * 0.1
        b2 = jax.random.normal(k_b2, (1, V), jnp.float32) * 0.1
        return inputs, emb, w1, b1, w2, b2

    k1, k2 = jax.random.split(key)

    # Case 1: module-sized small problem; tile_v=128 exercises 2 vocab tiles.
    args1 = make_problem(k1, B=8, C=8, V=256, E=32)
    out1 = jax.block_until_ready(cbow_forward(*args1, tile_v=128))
    ref1 = cbow_reference(*args1)
    assert out1.shape == ref1.shape == (8, 256)
    err1 = float(jnp.max(jnp.abs(out1 - ref1)))
    assert jnp.allclose(out1, ref1, atol=2e-2, rtol=2e-2), \
        f"case1 mismatch, max abs err = {err1}"

    # Case 2: exercises batch padding (60 -> 64), 4 batch blocks, 2 parallel
    # batch chunks and 3 vocab tiles.
    args2 = make_problem(k2, B=60, C=5, V=384, E=32)
    out2 = jax.block_until_ready(cbow_forward(*args2, block_b=16, tile_v=128))
    ref2 = cbow_reference(*args2)
    assert out2.shape == ref2.shape == (60, 384)
    err2 = float(jnp.max(jnp.abs(out2 - ref2)))
    assert jnp.allclose(out2, ref2, atol=2e-2, rtol=2e-2), \
        f"case2 mismatch, max abs err = {err2}"

    print("KERNEL_OK")
</pallas_src>

<mosaic_0001>
module attributes {stable_mosaic.version = 11 : i64} {
  func.func @kernel(%arg0: i32, %arg1: i32, %arg2: i32, %arg3: i32, %arg4: memref<64xi32, #tpu.memory_space<smem>>, %arg5: memref<256x128xf32, #tpu.memory_space<vmem>>, %arg6: memref<1x128xf32, #tpu.memory_space<vmem>>, %arg7: memref<128x128xbf16, #tpu.memory_space<vmem>>, %arg8: memref<1x128xf32, #tpu.memory_space<vmem>>, %arg9: memref<8x128xf32, #tpu.memory_space<vmem>>, %arg10: memref<8x128xf32, #tpu.memory_space<vmem>>, %arg11: memref<8x1xf32, #tpu.memory_space<vmem>>, %arg12: memref<8x1xf32, #tpu.memory_space<vmem>>) attributes {dimension_semantics = [#tpu.dimension_semantics<parallel>, #tpu.dimension_semantics<arbitrary>, #tpu.dimension_semantics<arbitrary>, #tpu.dimension_semantics<arbitrary>], iteration_bounds = array<i64: 1, 2, 2, 1>, scalar_prefetch = 1 : i64, scratch_operands = 3 : i64, tpu.core_type = #tpu.core_type<tc>, window_params = [{pipeline_mode = #tpu.pipeline_mode<synchronous>, transform_indices = @transform_0, window_bounds = array<i64: 256, 128>}, {pipeline_mode = #tpu.pipeline_mode<synchronous>, transform_indices = @transform_1, window_bounds = array<i64: 1, 128>}, {transform_indices = @transform_2, window_bounds = array<i64: 128, 128>}, {transform_indices = @transform_3, window_bounds = array<i64: 1, 128>}, {transform_indices = @transform_4, window_bounds = array<i64: 8, 128>}]} {
    %c1_i32 = arith.constant 1 : i32
    %0 = arith.muli %arg0, %c1_i32 : i32
    %1 = arith.addi %0, %arg3 : i32
    %c8_i32 = arith.constant 8 : i32
    %2 = arith.muli %1, %c8_i32 : i32
    %3 = tpu.assume_multiple %2, 8 : i32
    %c0_i32 = arith.constant 0 : i32
    %4 = arith.cmpi eq, %arg1, %c0_i32 : i32
    %c0_i32_0 = arith.constant 0 : i32
    %5 = arith.cmpi eq, %arg2, %c0_i32_0 : i32
    %6 = arith.andi %4, %5 : i1
    %7 = arith.extui %6 : i1 to i32
    %c0_i32_1 = arith.constant 0 : i32
    %8 = arith.cmpi ne, %7, %c0_i32_1 : i32
    scf.if %8 {
      %cst_13 = arith.constant 0xFF800000 : f32
      %28 = vector.broadcast %cst_13 : f32 to vector<8x1xf32>
      %29 = arith.index_cast %3 : i32 to index
      %c0_14 = arith.constant 0 : index
      %30 = vector.load %arg11[%29, %c0_14] : memref<8x1xf32, #tpu.memory_space<vmem>>, vector<8x1xf32>
      tpu.vector_store %arg11[%29, %c0_14], %28 {strides = array<i32>} : memref<8x1xf32, #tpu.memory_space<vmem>>, vector<8x1xf32>,
      %cst_15 = arith.constant 0.000000e+00 : f32
      %31 = vector.broadcast %cst_15 : f32 to vector<8x1xf32>
      %32 = arith.index_cast %3 : i32 to index
      %c0_16 = arith.constant 0 : index
      %33 = vector.load %arg12[%32, %c0_16] : memref<8x1xf32, #tpu.memory_space<vmem>>, vector<8x1xf32>
      tpu.vector_store %arg12[%32, %c0_16], %31 {strides = array<i32>} : memref<8x1xf32, #tpu.memory_space<vmem>>, vector<8x1xf32>,
      %c0_17 = arith.constant 0 : index
      %c0_18 = arith.constant 0 : index
      %34 = vector.load %arg6[%c0_17, %c0_18] : memref<1x128xf32, #tpu.memory_space<vmem>>, vector<1x128xf32>
      %c0_i32_19 = arith.constant 0 : i32
      %c8_i32_20 = arith.constant 8 : i32
      %35 = arith.addi %c0_i32_19, %c8_i32_20 : i32
      %c1_i32_21 = arith.constant 1 : i32
      scf.for %arg13 = %c0_i32_19 to %35 step %c1_i32_21  : i32 {
        %36 = arith.addi %3, %arg13 : i32
        %c8_i32_23 = arith.constant 8 : i32
        %37 = arith.muli %36, %c8_i32_23 : i32
        %38 = arith.index_cast %37 : i32 to index
        %39 = memref.load %arg4[%38] : memref<64xi32, #tpu.memory_space<smem>>
        %40 = arith.index_cast %39 : i32 to index
        %c0_24 = arith.constant 0 : index
        %41 = vector.load %arg5[%40, %c0_24] : memref<256x128xf32, #tpu.memory_space<vmem>>, vector<1x128xf32>
        %c1_i32_25 = arith.constant 1 : i32
        %42 = arith.addi %37, %c1_i32_25 : i32
        %43 = arith.index_cast %42 : i32 to index
        %44 = memref.load %arg4[%43] : memref<64xi32, #tpu.memory_space<smem>>
        %45 = arith.index_cast %44 : i32 to index
        %c0_26 = arith.constant 0 : index
        %46 = vector.load %arg5[%45, %c0_26] : memref<256x128xf32, #tpu.memory_space<vmem>>, vector<1x128xf32>
        %47 = arith.addf %41, %46 : vector<1x128xf32>
        %c2_i32 = arith.constant 2 : i32
        %48 = arith.addi %37, %c2_i32 : i32
        %49 = arith.index_cast %48 : i32 to index
        %50 = memref.load %arg4[%49] : memref<64xi32, #tpu.memory_space<smem>>
        %51 = arith.index_cast %50 : i32 to index
        %c0_27 = arith.constant 0 : index
        %52 = vector.load %arg5[%51, %c0_27] : memref<256x128xf32, #tpu.memory_space<vmem>>, vector<1x128xf32>
        %53 = arith.addf %47, %52 : vector<1x128xf32>
        %c3_i32 = arith.constant 3 : i32
        %54 = arith.addi %37, %c3_i32 : i32
        %55 = arith.index_cast %54 : i32 to index
        %56 = memref.load %arg4[%55] : memref<64xi32, #tpu.memory_space<smem>>
        %57 = arith.index_cast %56 : i32 to index
        %c0_28 = arith.constant 0 : index
        %58 = vector.load %arg5[%57, %c0_28] : memref<256x128xf32, #tpu.memory_space<vmem>>, vector<1x128xf32>
        %59 = arith.addf %53, %58 : vector<1x128xf32>
        %c4_i32 = arith.constant 4 : i32
        %60 = arith.addi %37, %c4_i32 : i32
        %61 = arith.index_cast %60 : i32 to index
        %62 = memref.load %arg4[%61] : memref<64xi32, #tpu.memory_space<smem>>
        %63 = arith.index_cast %62 : i32 to index
        %c0_29 = arith.constant 0 : index
        %64 = vector.load %arg5[%63, %c0_29] : memref<256x128xf32, #tpu.memory_space<vmem>>, vector<1x128xf32>
        %65 = arith.addf %59, %64 : vector<1x128xf32>
        %c5_i32 = arith.constant 5 : i32
        %66 = arith.addi %37, %c5_i32 : i32
        %67 = arith.index_cast %66 : i32 to index
        %68 = memref.load %arg4[%67] : memref<64xi32, #tpu.memory_space<smem>>
        %69 = arith.index_cast %68 : i32 to index
        %c0_30 = arith.constant 0 : index
        %70 = vector.load %arg5[%69, %c0_30] : memref<256x128xf32, #tpu.memory_space<vmem>>, vector<1x128xf32>
        %71 = arith.addf %65, %70 : vector<1x128xf32>
        %c6_i32 = arith.constant 6 : i32
        %72 = arith.addi %37, %c6_i32 : i32
        %73 = arith.index_cast %72 : i32 to index
        %74 = memref.load %arg4[%73] : memref<64xi32, #tpu.memory_space<smem>>
        %75 = arith.index_cast %74 : i32 to index
        %c0_31 = arith.constant 0 : index
        %76 = vector.load %arg5[%75, %c0_31] : memref<256x128xf32, #tpu.memory_space<vmem>>, vector<1x128xf32>
        %77 = arith.addf %71, %76 : vector<1x128xf32>
        %c7_i32 = arith.constant 7 : i32
        %78 = arith.addi %37, %c7_i32 : i32
        %79 = arith.index_cast %78 : i32 to index
        %80 = memref.load %arg4[%79] : memref<64xi32, #tpu.memory_space<smem>>
        %81 = arith.index_cast %80 : i32 to index
        %c0_32 = arith.constant 0 : index
        %82 = vector.load %arg5[%81, %c0_32] : memref<256x128xf32, #tpu.memory_space<vmem>>, vector<1x128xf32>
        %83 = arith.addf %77, %82 : vector<1x128xf32>
        %84 = arith.addf %83, %34 : vector<1x128xf32>
        %cst_33 = arith.constant 0.000000e+00 : f32
        %85 = vector.broadcast %cst_33 : f32 to vector<1x128xf32>
        %86 = arith.maximumf %84, %85 : vector<1x128xf32>
        %87 = arith.addi %3, %arg13 : i32
        %88 = arith.index_cast %87 : i32 to index
        %c0_34 = arith.constant 0 : index
        %89 = vector.load %arg10[%88, %c0_34] : memref<8x128xf32, #tpu.memory_space<vmem>>, vector<1x128xf32>
        tpu.vector_store %arg10[%88, %c0_34], %86 {strides = array<i32>} : memref<8x128xf32, #tpu.memory_space<vmem>>, vector<1x128xf32>,
      }
      %c8_i32_22 = arith.constant 8 : i32
    } else {
    }
    %9 = arith.index_cast %3 : i32 to index
    %c0 = arith.constant 0 : index
    %10 = vector.load %arg10[%9, %c0] : memref<8x128xf32, #tpu.memory_space<vmem>>, vector<8x128xf32>
    %11 = arith.truncf %10 : vector<8x128xf32> to vector<8x128xbf16>
    %c0_2 = arith.constant 0 : index
    %c0_3 = arith.constant 0 : index
    %12 = vector.load %arg7[%c0_2, %c0_3] : memref<128x128xbf16, #tpu.memory_space<vmem>>, vector<128x128xbf16>
    %cst = arith.constant dense<0.000000e+00> : vector<8x128xf32>
    %13 = tpu.matmul %11, %12, %cst {dimension_numbers = #tpu.dot_dimension_numbers<[1], [0], [0], [1], [0, 0, 1, 1], [], []>} : vector<8x128xbf16>, vector<128x128xbf16>, vector<8x128xf32> -> vector<8x128xf32>
    %c0_4 = arith.constant 0 : index
    %c0_5 = arith.constant 0 : index
    %14 = vector.load %arg8[%c0_4, %c0_5] : memref<1x128xf32, #tpu.memory_space<vmem>>, vector<1x128xf32>
    %15 = vector.broadcast %14 : vector<1x128xf32> to vector<8x128xf32>
    %16 = arith.addf %13, %15 : vector<8x128xf32>
    %c0_i32_6 = arith.constant 0 : i32
    %17 = arith.cmpi eq, %arg1, %c0_i32_6 : i32
    %18 = arith.extui %17 : i1 to i32
    %c0_i32_7 = arith.constant 0 : i32
    %19 = arith.cmpi ne, %18, %c0_i32_7 : i32
    scf.if %19 {
      %28 = arith.index_cast %3 : i32 to index
      %c0_13 = arith.constant 0 : index
      %29 = vector.load %arg11[%28, %c0_13] : memref<8x1xf32, #tpu.memory_space<vmem>>, vector<8x1xf32>
      %cst_14 = arith.constant dense<0xFF800000> : vector<8xf32>
      %30 = vector.multi_reduction <maximumf>, %16, %cst_14 [1] : vector<8x128xf32> to vector<8xf32>
      %31 = vector.shape_cast %30 : vector<8xf32> to vector<8x1xf32>
      %32 = arith.maximumf %29, %31 : vector<8x1xf32>
      %33 = arith.index_cast %3 : i32 to index
      %c0_15 = arith.constant 0 : index
      %34 = vector.load %arg12[%33, %c0_15] : memref<8x1xf32, #tpu.memory_space<vmem>>, vector<8x1xf32>
      %35 = arith.subf %29, %32 : vector<8x1xf32>
      %36 = math.exp %35 : vector<8x1xf32>
      %37 = arith.mulf %34, %36 : vector<8x1xf32>
      %38 = vector.broadcast %32 : vector<8x1xf32> to vector<8x128xf32>
      %39 = arith.subf %16, %38 : vector<8x128xf32>
      %40 = math.exp %39 : vector<8x128xf32>
      %cst_16 = arith.constant dense<0.000000e+00> : vector<8xf32>
      %41 = vector.multi_reduction <add>, %40, %cst_16 [1] : vector<8x128xf32> to vector<8xf32>
      %42 = vector.shape_cast %41 : vector<8xf32> to vector<8x1xf32>
      %43 = arith.addf %37, %42 : vector<8x1xf32>
      %44 = arith.index_cast %3 : i32 to index
      %c0_17 = arith.constant 0 : index
      %45 = vector.load %arg12[%44, %c0_17] : memref<8x1xf32, #tpu.memory_space<vmem>>, vector<8x1xf32>
      tpu.vector_store %arg12[%44, %c0_17], %43 {strides = array<i32>} : memref<8x1xf32, #tpu.memory_space<vmem>>, vector<8x1xf32>,
      %46 = arith.index_cast %3 : i32 to index
      %c0_18 = arith.constant 0 : index
      %47 = vector.load %arg11[%46, %c0_18] : memref<8x1xf32, #tpu.memory_space<vmem>>, vector<8x1xf32>
      tpu.vector_store %arg11[%46, %c0_18], %32 {strides = array<i32>} : memref<8x1xf32, #tpu.memory_space<vmem>>, vector<8x1xf32>,
    } else {
    }
    %c1_i32_8 = arith.constant 1 : i32
    %20 = arith.cmpi eq, %arg1, %c1_i32_8 : i32
    %c0_i32_9 = arith.constant 0 : i32
    %21 = arith.cmpi eq, %arg2, %c0_i32_9 : i32
    %22 = arith.andi %20, %21 : i1
    %23 = arith.extui %22 : i1 to i32
    %c0_i32_10 = arith.constant 0 : i32
    %24 = arith.cmpi ne, %23, %c0_i32_10 : i32
    scf.if %24 {
      %28 = arith.index_cast %3 : i32 to index
      %c0_13 = arith.constant 0 : index
      %29 = vector.load %arg11[%28, %c0_13] : memref<8x1xf32, #tpu.memory_space<vmem>>, vector<8x1xf32>
      %30 = arith.index_cast %3 : i32 to index
      %c0_14 = arith.constant 0 : index
      %31 = vector.load %arg12[%30, %c0_14] : memref<8x1xf32, #tpu.memory_space<vmem>>, vector<8x1xf32>
      %32 = math.log %31 : vector<8x1xf32>
      %33 = arith.addf %29, %32 : vector<8x1xf32>
      %34 = arith.index_cast %3 : i32 to index
      %c0_15 = arith.constant 0 : index
      %35 = vector.load %arg11[%34, %c0_15] : memref<8x1xf32, #tpu.memory_space<vmem>>, vector<8x1xf32>
      tpu.vector_store %arg11[%34, %c0_15], %33 {strides = array<i32>} : memref<8x1xf32, #tpu.memory_space<vmem>>, vector<8x1xf32>,
    } else {
    }
    %c1_i32_11 = arith.constant 1 : i32
    %25 = arith.cmpi eq, %arg1, %c1_i32_11 : i32
    %26 = arith.extui %25 : i1 to i32
    %c0_i32_12 = arith.constant 0 : i32
    %27 = arith.cmpi ne, %26, %c0_i32_12 : i32
    scf.if %27 {
      %28 = arith.index_cast %3 : i32 to index
      %c0_13 = arith.constant 0 : index
      %29 = vector.load %arg11[%28, %c0_13] : memref<8x1xf32, #tpu.memory_space<vmem>>, vector<8x1xf32>
      %30 = vector.broadcast %29 : vector<8x1xf32> to vector<8x128xf32>
      %31 = arith.subf %16, %30 : vector<8x128xf32>
      %c0_14 = arith.constant 0 : index
      %c0_15 = arith.constant 0 : index
      %32 = vector.load %arg9[%c0_14, %c0_15] : memref<8x128xf32, #tpu.memory_space<vmem>>, vector<8x128xf32>
      tpu.vector_store %arg9[%c0_14, %c0_15], %31 {strides = array<i32>} : memref<8x128xf32, #tpu.memory_space<vmem>>, vector<8x128xf32>,
    } else {
    }
    return
  }
  func.func @transform_0(%arg0: i32, %arg1: i32, %arg2: i32, %arg3: i32, %arg4: memref<64xi32, #tpu.memory_space<smem>>) -> (i32, i32) {
    %c0_i32 = arith.constant 0 : i32
    %c0_i32_0 = arith.constant 0 : i32
    %c0_i32_1 = arith.constant 0 : i32
    return %c0_i32, %c0_i32_0 : i32, i32
  }
  func.func @transform_1(%arg0: i32, %arg1: i32, %arg2: i32, %arg3: i32, %arg4: memref<64xi32, #tpu.memory_space<smem>>) -> (i32, i32) {
    %c0_i32 = arith.constant 0 : i32
    %c0_i32_0 = arith.constant 0 : i32
    %c0_i32_1 = arith.constant 0 : i32
    return %c0_i32, %c0_i32_0 : i32, i32
  }
  func.func @transform_2(%arg0: i32, %arg1: i32, %arg2: i32, %arg3: i32, %arg4: memref<64xi32, #tpu.memory_space<smem>>) -> (i32, i32) {
    %c0_i32 = arith.constant 0 : i32
    %c0_i32_0 = arith.constant 0 : i32
    return %c0_i32, %arg2 : i32, i32
  }
  func.func @transform_3(%arg0: i32, %arg1: i32, %arg2: i32, %arg3: i32, %arg4: memref<64xi32, #tpu.memory_space<smem>>) -> (i32, i32) {
    %c0_i32 = arith.constant 0 : i32
    %c0_i32_0 = arith.constant 0 : i32
    return %c0_i32, %arg2 : i32, i32
  }
  func.func @transform_4(%arg0: i32, %arg1: i32, %arg2: i32, %arg3: i32, %arg4: memref<64xi32, #tpu.memory_space<smem>>) -> (i32, i32) {
    %c1_i32 = arith.constant 1 : i32
    %0 = arith.muli %arg0, %c1_i32 : i32
    %c1_i32_0 = arith.constant 1 : i32
    %1 = arith.cmpi eq, %arg1, %c1_i32_0 : i32
    %c0_i32 = arith.constant 0 : i32
    %2 = arith.select %1, %arg3, %c0_i32 : i32
    %3 = arith.addi %0, %2 : i32
    %c1_i32_1 = arith.constant 1 : i32
    %4 = arith.cmpi eq, %arg1, %c1_i32_1 : i32
    %c0_i32_2 = arith.constant 0 : i32
    %5 = arith.select %4, %arg2, %c0_i32_2 : i32
    %c0_i32_3 = arith.constant 0 : i32
    return %3, %5 : i32, i32
  }
}

</mosaic_0001>

<llo_original>
// kernel: tpu_custom_call.1
$region0: #{tpu_custom_call.1}
  #allocation0 [shape = 'u32[]', space=smem, size = 0x4, offset = 0x4, fixed_abs, tag = 'smem constant byte address 0x4 - core index']
  #allocation1 [shape = 'u32[72,128]{1,0:T(1,128)}', space=vmem, size = 0x9000, scoped, tag = 'internal scratch']
  #allocation2 [shape = 'f32[8,128]{1,0:T(8,128)}', space=vmem, size = 0x1000, scoped, tag = 'scratch operand']
  #allocation3 [shape = 'f32[8,1]{1,0:T(8,128)}', space=vmem, size = 0x1000, scoped, tag = 'scratch operand']
  #allocation4 [shape = 'f32[8,1]{1,0:T(8,128)}', space=vmem, size = 0x1000, scoped, tag = 'scratch operand']
  #allocation5 [shape = 's32[1]{0}', space=sflag, size = 0x4, scoped, tag = 'scoped memory for tpu_custom_call.1']
  #allocation6 [shape = 'u8[512]{0}', space=smem, size = 0x200, scoped, tag = 'prefetched SMEM operand 0']
  %s0 = inlined_call_operand.hbm [shape: s32[64], index: 0, kind: input, shape index: {}]
  %s1 = inlined_call_operand.hbm [shape: f32[256,128], index: 1, kind: input, shape index: {}]
  %s2 = inlined_call_operand.vmem [shape: f32[1,128], index: 2, kind: input, shape index: {}]
  %s3 = inlined_call_operand.hbm [shape: bf16[128,256], index: 3, kind: input, shape index: {}]
  %s4 = inlined_call_operand.vmem [shape: f32[1,256], index: 4, kind: input, shape index: {}]
  %s5 = inlined_call_operand.hbm [shape: f32[8,256], index: 5, kind: output, shape index: {}]
  %s6 = sld [smem:[#allocation0]]
  $region80: #{tpu_custom_call.1} parent=0
    _
  %s8 = ssub.s32 1, %s6
  %s9 = scalar_select 0, %s8, %s6
  %s11 = sshll.u32 %s0, 4
  %s12 = int_to_ptr.hbm [resolvable:$true] %s11
  %14 = dma.hbm_to_smem %s12, 16, [#allocation6], [#allocation5]
  %16 = dma.done [#allocation5], 16
  %17 = sfence
  $region1: #{tpu_custom_call.1} parent=0
    #allocation7 [shape = 'u8[131072]{0}', space=vmem, size = 0x20000, scoped, tag = 'input window, operand 1, single buffered']
    #allocation8 [shape = 's32[2]{0}', space=sflag, size = 0x8, scoped, tag = 'scoped memory for tpu_custom_call.1']
    #allocation9 [shape = 's32[2]{0}', space=sflag, size = 0x8, scoped, tag = 'scoped memory for tpu_custom_call.1']
    #allocation10 [shape = 'u8[65536]{0}', space=vmem, size = 0x10000, scoped, tag = 'input window, operand 3']
    #allocation11 [shape = 's32[2]{0}', space=sflag, size = 0x8, scoped, tag = 'scoped memory for tpu_custom_call.1']
    #allocation12 [shape = 'u8[8192]{0}', space=vmem, size = 0x2000, scoped, tag = 'output window, operand 0']
    %18 = vsyncpa [#allocation8], 0
    %19 = vsyncpa [#allocation11], 0
    %s20 = scalar_lea.sflag [#allocation11], 1
    %21 = vsyncpa %s20, 0
    %22 = vsyncpa [#allocation9], 0
    %s23 = scalar_lea.sflag [#allocation9], 1
    %24 = vsyncpa %s23, 0
    loop: start=0, step=1, limit=6
    $region2: #{tpu_custom_call.1} parent=1 // loop_pre_header
      _
    $region3: #{tpu_custom_call.1} parent=1 // loop_header
      %s26 = sphi 0, %s30
      %p27 = scmp.ge.s32.totalorder %s26, 6
      %s33 = sphi 0, %s59
      %s34 = sphi 0, %s55
      %s35 = sphi 0, %s51
      %s36 = sphi 0, %s47
      %s37 = sphi 0, %s33
      %s38 = sphi 0, %s34
      %s39 = sphi 0, %s35
      %s40 = sphi 0, %s36
      %s41 = sphi 0, %s37
      %s42 = sphi 0, %s38
      %s43 = sphi 0, %s39
      %s44 = sphi 0, %s40
      %s60 = sphi 0, %s60
      %s62 = sphi 0, %s60
      %s63 = sphi 0, %s62
      %s77 = sphi 0, %s63
      %s81 = sphi 0, %s81
      %s83 = sphi 0, %s81
      %s84 = sphi 0, %s83
      %s98 = sphi 0, %s84
      %s104 = sphi 0, %s106
      %s107 = sphi 0, %s104
      %s108 = sphi 0, %s107
      %s124 = sphi 0, %s108
      %s130 = sphi 0, %s132
      %s133 = sphi 0, %s130
      %s134 = sphi 0, %s133
      %s150 = sphi 0, %s134
      %s166 = sphi 0, %s168
      %s169 = sphi 0, %s166
      %s170 = sphi 0, %s169
      %s186 = sphi 0, %s170
    $region4: #{tpu_custom_call.1} parent=1 // loop_header_branch
      %29 = sbr.rel (%p27) target = $region8
    $region5: #{tpu_custom_call.1} parent=1 // loop_body
      %s31 = ssub.s32 %s26, 1
      %s32 = ssub.s32 %s26, 2
      %s45 = sadd.s32 1, %s36
      %p46 = scmp.ge.s32.totalorder %s45, 1
      %s47 = scalar_select %p46, 0, %s45
      %s48 = sadd.s32 1, %s35
      %s49 = scalar_select %p46, %s48, %s35
      %p50 = scmp.ge.s32.totalorder %s49, 2
      %s51 = scalar_select %p50, 0, %s49
      %s52 = sadd.s32 1, %s34
      %s53 = scalar_select %p50, %s52, %s34
      %p54 = scmp.ge.s32.totalorder %s53, 2
      %s55 = scalar_select %p54, 0, %s53
      %s56 = sadd.s32 1, %s33
      %s57 = scalar_select %p54, %s56, %s33
      %p58 = scmp.ge.s32.totalorder %s57, 1
      %s59 = scalar_select %p58, 0, %s57
      %s61 = sadd.s32 %s60, 1
      %p64 = scmp.eq.s32.totalorder %s26, 3
      %p65 = scmp.ne.s32.totalorder %s60, %s62
      %p66 = scmp.eq.s32.totalorder %s26, 0
      %p67 = por %p65, %p66
      %p68 = scmp.ne.s32.totalorder %s60, %s62
      %p69 = scmp.eq.s32.totalorder %s31, 3
      %p70 = por %p68, %p69
      %p71 = scmp.ne.s32.totalorder %s62, %s63
      %p72 = scmp.eq.s32.totalorder %s31, 0
      %p73 = por %p71, %p72
      %p74 = scmp.ne.s32.totalorder %s62, %s63
      %p75 = scmp.eq.s32.totalorder %s32, 3
      %p76 = por %p74, %p75
      %p78 = scmp.ne.s32.totalorder %s63, %s77
      %p79 = scmp.eq.s32.totalorder %s32, 0
      %p80 = por %p78, %p79
      %s82 = sadd.s32 %s81, 1
      %p85 = scmp.eq.s32.totalorder %s26, 3
      %p86 = scmp.ne.s32.totalorder %s81, %s83
      %p87 = scmp.eq.s32.totalorder %s26, 0
      %p88 = por %p86, %p87
      %p89 = scmp.ne.s32.totalorder %s81, %s83
      %p90 = scmp.eq.s32.totalorder %s31, 3
      %p91 = por %p89, %p90
      %p92 = scmp.ne.s32.totalorder %s83, %s84
      %p93 = scmp.eq.s32.totalorder %s31, 0
      %p94 = por %p92, %p93
      %p95 = scmp.ne.s32.totalorder %s83, %s84
      %p96 = scmp.eq.s32.totalorder %s32, 3
      %p97 = por %p95, %p96
      %p99 = scmp.ne.s32.totalorder %s84, %s98
      %p100 = scmp.eq.s32.totalorder %s32, 0
      %p101 = por %p99, %p100
      %s102 = ssub.s32 %s35, %s51
      %p103 = scmp.eq.s32.totalorder %s102, 0
      %s105 = sadd.s32 %s104, 1
      %s106 = scalar_select %p103, %s104, %s105
      %p109 = pneg %p103
      %p110 = scmp.eq.s32.totalorder %s26, 3
      %p111 = por %p109, %p110
      %p112 = scmp.ne.s32.totalorder %s104, %s107
      %p113 = scmp.eq.s32.totalorder %s26, 0
      %p114 = por %p112, %p113
      %p115 = scmp.ne.s32.totalorder %s104, %s107
      %p116 = scmp.eq.s32.totalorder %s31, 3
      %p117 = por %p115, %p116
      %p118 = scmp.ne.s32.totalorder %s107, %s108
      %p119 = scmp.eq.s32.totalorder %s31, 0
      %p120 = por %p118, %p119
      %p121 = scmp.ne.s32.totalorder %s107, %s108
      %p122 = scmp.eq.s32.totalorder %s32, 3
      %p123 = por %p121, %p122
      %p125 = scmp.ne.s32.totalorder %s108, %s124
      %p126 = scmp.eq.s32.totalorder %s32, 0
      %p127 = por %p125, %p126
      %s128 = ssub.s32 %s35, %s51
      %p129 = scmp.eq.s32.totalorder %s128, 0
      %s131 = sadd.s32 %s130, 1
      %s132 = scalar_select %p129, %s130, %s131
      %p135 = pneg %p129
      %p136 = scmp.eq.s32.totalorder %s26, 3
      %p137 = por %p135, %p136
      %p138 = scmp.ne.s32.totalorder %s130, %s133
      %p139 = scmp.eq.s32.totalorder %s26, 0
      %p140 = por %p138, %p139
      %p141 = scmp.ne.s32.totalorder %s130, %s133
      %p142 = scmp.eq.s32.totalorder %s31, 3
      %p143 = por %p141, %p142
      %p144 = scmp.ne.s32.totalorder %s133, %s134
      %p145 = scmp.eq.s32.totalorder %s31, 0
      %p146 = por %p144, %p145
      %p147 = scmp.ne.s32.totalorder %s133, %s134
      %p148 = scmp.eq.s32.totalorder %s32, 3
      %p149 = por %p147, %p148
      %p151 = scmp.ne.s32.totalorder %s134, %s150
      %p152 = scmp.eq.s32.totalorder %s32, 0
      %p153 = por %p151, %p152
      %p154 = scmp.eq.s32.totalorder %s34, 1
      %s155 = scalar_select %p154, %s36, 0
      %s156 = sadd.s32 %s33, %s155
      %s157 = scalar_select %p154, %s35, 0
      %p158 = scmp.eq.s32.totalorder %s55, 1
      %s159 = scalar_select %p158, %s47, 0
      %s160 = sadd.s32 %s59, %s159
      %s161 = scalar_select %p158, %s51, 0
      %s162 = ssub.s32 %s156, %s160
      %s163 = ssub.s32 %s157, %s161
      %s164 = sor.u32 %s162, %s163
      %p165 = scmp.eq.s32.totalorder %s164, 0
      %s167 = sadd.s32 %s166, 1
      %s168 = scalar_select %p165, %s166, %s167
      %p171 = pneg %p165
      %p172 = scmp.eq.s32.totalorder %s26, 3
      %p173 = por %p171, %p172
      %p174 = scmp.ne.s32.totalorder %s166, %s169
      %p175 = scmp.eq.s32.totalorder %s26, 0
      %p176 = por %p174, %p175
      %p177 = scmp.ne.s32.totalorder %s166, %s169
      %p178 = scmp.eq.s32.totalorder %s31, 3
      %p179 = por %p177, %p178
      %p180 = scmp.ne.s32.totalorder %s169, %s170
      %p181 = scmp.eq.s32.totalorder %s31, 0
      %p182 = por %p180, %p181
      %p183 = scmp.ne.s32.totalorder %s169, %s170
      %p184 = scmp.eq.s32.totalorder %s32, 3
      %p185 = por %p183, %p184
      %p187 = scmp.ne.s32.totalorder %s170, %s186
      %p188 = scmp.eq.s32.totalorder %s32, 0
      %p189 = por %p187, %p188
      %p190 = scmp.le.s32.totalorder 1, %s26
      %p191 = scmp.lt.s32.totalorder %s26, 5
      %p192 = pnand %p190, %p191
      %p193 = pneg %p192
      // Predicated region
      $region9: #{tpu_custom_call.1} parent=5 // pred_check
        _
      $region10: #{tpu_custom_call.1} parent=5 // pred_check_branch
        %195 = sbr.rel (%p192) target = $region12
      $region11: #{tpu_custom_call.1} parent=5 // pred_region
        %s196 = ssub.s32 %s26, 1
        // Predicated region
        $region13: #{tpu_custom_call.1} parent=11 // pred_check
          %p197 = pneg %p73
        $region14: #{tpu_custom_call.1} parent=11 // pred_check_branch
          %199 = sbr.rel (%p197) target = $region16
        $region15: #{tpu_custom_call.1} parent=11 // pred_region
          %201 = vsyncadd [#allocation8], 0
          %s202 = sshll.u32 %s1, 4
          %s203 = int_to_ptr.hbm [resolvable:$true] %s202
          %s204 = sshll.u32 [#allocation7], 4
          %s205 = int_to_ptr.vmem [resolvable:$true] %s204
          %210 = dma.hbm_to_vmem [thread:$0]  %s203, 4096, %s205, [#allocation8], 128, 128, 8
        $region16: #{tpu_custom_call.1} parent=11 // pred_fallthru
          _
        // Predicated region
        $region17: #{tpu_custom_call.1} parent=11 // pred_check
          %p211 = pneg %p94
        $region18: #{tpu_custom_call.1} parent=11 // pred_check_branch
          %213 = sbr.rel (%p211) target = $region20
        $region19: #{tpu_custom_call.1} parent=11 // pred_region
          _
        $region20: #{tpu_custom_call.1} parent=11 // pred_fallthru
          _
      $region12: #{tpu_custom_call.1} parent=5 // pred_fallthru
        _
      %p214 = scmp.lt.s32.totalorder %s26, 4
      // Predicated region
      $region21: #{tpu_custom_call.1} parent=5 // pred_check
        %p215 = pneg %p214
      $region22: #{tpu_custom_call.1} parent=5 // pred_check_branch
        %217 = sbr.rel (%p215) target = $region24
      $region23: #{tpu_custom_call.1} parent=5 // pred_region
        // Predicated region
        $region25: #{tpu_custom_call.1} parent=23 // pred_check
          %p218 = pneg %p114
        $region26: #{tpu_custom_call.1} parent=23 // pred_check_branch
          %220 = sbr.rel (%p218) target = $region28
        $region27: #{tpu_custom_call.1} parent=23 // pred_region
          %s221 = sand.u32 %s104, 1
          %s222 = scalar_lea.sflag [#allocation11], %s221
          %s223 = sand.u32 %s104, 1
          %s224 = smul.addr %s223, 64
          %s225 = scalar_lea.vmem [#allocation10], %s224
          %227 = vsyncadd %s222, 0
          %s228 = smul.addr %s35, 4
          %s229 = scalar_lea.hbm %s3, %s228
          %s230 = sshll.u32 %s229, 4
          %s231 = int_to_ptr.hbm [resolvable:$true] %s230
          %s232 = sshll.u32 %s225, 4
          %s233 = int_to_ptr.vmem [resolvable:$true] %s232
          %238 = dma.hbm_to_vmem [thread:$0]  %s231, 1024, %s233, %s222, 128, 64, 4
        $region28: #{tpu_custom_call.1} parent=23 // pred_fallthru
          _
        // Predicated region
        $region29: #{tpu_custom_call.1} parent=23 // pred_check
          %p239 = pneg %p140
        $region30: #{tpu_custom_call.1} parent=23 // pred_check_branch
          %241 = sbr.rel (%p239) target = $region32
        $region31: #{tpu_custom_call.1} parent=23 // pred_region
          %p242 = scmp.lt.s32.totalorder %s35, 1
          %s243 = scalar_select %p242, %s35, 1
          %s244 = scalar_lea.vmem %s4, %s243
        $region32: #{tpu_custom_call.1} parent=23 // pred_fallthru
          _
      $region24: #{tpu_custom_call.1} parent=5 // pred_fallthru
        _
      %p245 = scmp.le.s32.totalorder 1, %s26
      %p246 = scmp.lt.s32.totalorder %s26, 5
      %p247 = pnand %p245, %p246
      %p248 = pneg %p247
      // Predicated region
      $region33: #{tpu_custom_call.1} parent=5 // pred_check
        _
      $region34: #{tpu_custom_call.1} parent=5 // pred_check_branch
        %250 = sbr.rel (%p247) target = $region36
      $region35: #{tpu_custom_call.1} parent=5 // pred_region
        %s251 = ssub.s32 %s26, 1
        // Predicated region
        $region37: #{tpu_custom_call.1} parent=35 // pred_check
          %p252 = pneg %p73
        $region38: #{tpu_custom_call.1} parent=35 // pred_check_branch
          %254 = sbr.rel (%p252) target = $region40
        $region39: #{tpu_custom_call.1} parent=35 // pred_region
          %256 = dma.done [#allocation8], 4096
        $region40: #{tpu_custom_call.1} parent=35 // pred_fallthru
          _
        %s257 = sand.u32 %s107, 1
        %s258 = scalar_lea.sflag [#allocation11], %s257
        %s259 = sand.u32 %s107, 1
        %s260 = smul.addr %s259, 64
        %s261 = scalar_lea.vmem [#allocation10], %s260
        // Predicated region
        $region41: #{tpu_custom_call.1} parent=35 // pred_check
          %p262 = pneg %p120
        $region42: #{tpu_custom_call.1} parent=35 // pred_check_branch
          %264 = sbr.rel (%p262) target = $region44
        $region43: #{tpu_custom_call.1} parent=35 // pred_region
          %266 = dma.done %s258, 1024
        $region44: #{tpu_custom_call.1} parent=35 // pred_fallthru
          _
        %p267 = pneg %p73
        %p268 = pneg %p70
        %p269 = pneg %p94
        %p270 = pneg %p91
        %s271 = sand.u32 %s107, 1
        %s272 = scalar_lea.sflag [#allocation11], %s271
        %s273 = sand.u32 %s107, 1
        %s274 = smul.addr %s273, 64
        %s275 = scalar_lea.vmem [#allocation10], %s274
        %p276 = pneg %p120
        %p277 = pneg %p117
        %p278 = scmp.lt.s32.totalorder %s39, 1
        %s279 = scalar_select %p278, %s39, 1
        %s280 = scalar_lea.vmem %s4, %s279
        %p281 = pneg %p146
        %p282 = pneg %p143
        %p283 = pneg %p182
        %p284 = pneg %p179
        %s285 = sand.u32 %s169, 1
        %s286 = scalar_lea.sflag [#allocation9], %s285
        %s287 = sand.u32 %s169, 1
        %s288 = smul.addr %s287, 8
        %s289 = scalar_lea.vmem [#allocation12], %s288
        %p290 = scmp.lt.s32.totalorder %s39, 1
        %s291 = scalar_select %p290, %s39, 1
        %s292 = scalar_lea.vmem %s4, %s291
        %p293 = scmp.eq.s32.totalorder %s38, 1
        %s294 = scalar_select %p293, %s40, 0
        %s295 = sadd.s32 %s37, %s294
        %s296 = scalar_select %p293, %s39, 0
        %s297 = sadd.s32 %s37, %s40
        %s298 = smul.u32 %s297, 8
        %p299 = scmp.eq.s32.totalorder %s38, 0
        %p300 = scmp.eq.s32.totalorder %s39, 0
        %p301 = pnand %p299, %p300
        %p302 = pneg %p301
        // Predicated region
        $region45: #{tpu_custom_call.1} parent=35 // pred_check
          _
        $region46: #{tpu_custom_call.1} parent=35 // pred_check_branch
          %304 = sbr.rel (%p301) target = $region48
        $region47: #{tpu_custom_call.1} parent=35 // pred_region
          %s305 = scalar_lea.vmem [#allocation3], %s298
          %vm306 = vcmask 7168
          %307 = vst.msk [vmem:[%s305] sm:$0xff] %vm306, -inf
          %s308 = scalar_lea.vmem [#allocation4], %s298
          %309 = vst.msk [vmem:[%s308] sm:$0xff] %vm306, 0.0
          %v310 = vld [vmem:[%s2] sm:$0x1]
          loop: start=0, step=1, limit=8
          $region49: #{tpu_custom_call.1} parent=47 // loop_pre_header
            _
          $region50: #{tpu_custom_call.1} parent=47 // loop_header
            %s312 = sphi 0, %s316
            %p313 = scmp.ge.s32.totalorder %s312, 8
          $region51: #{tpu_custom_call.1} parent=47 // loop_header_branch
            %315 = sbr.rel (%p313) target = $region55
          $region52: #{tpu_custom_call.1} parent=47 // loop_body
            %s317 = sadd.s32 %s298, %s312
            %s318 = smul.u32 %s317, 8
            %s319 = sld [smem:[#allocation6 + %s318]]
            %s320 = scalar_lea.vmem [#allocation7], %s319
            %v321 = vld [vmem:[%s320] sm:$0x1]
            %s322 = sadd.s32 %s318, 1
            %s323 = sld [smem:[#allocation6 + %s322]]
            %s324 = scalar_lea.vmem [#allocation7], %s323
            %v325 = vld [vmem:[%s324] sm:$0x1]
            %v326 = vadd.f32 %v321, %v325
            %s327 = sadd.s32 %s318, 2
            %s328 = sld [smem:[#allocation6 + %s327]]
            %s329 = scalar_lea.vmem [#allocation7], %s328
            %v330 = vld [vmem:[%s329] sm:$0x1]
            %v331 = vadd.f32 %v326, %v330
            %s332 = sadd.s32 %s318, 3
            %s333 = sld [smem:[#allocation6 + %s332]]
            %s334 = scalar_lea.vmem [#allocation7], %s333
            %v335 = vld [vmem:[%s334] sm:$0x1]
            %v336 = vadd.f32 %v331, %v335
            %s337 = sadd.s32 %s318, 4
            %s338 = sld [smem:[#allocation6 + %s337]]
            %s339 = scalar_lea.vmem [#allocation7], %s338
            %v340 = vld [vmem:[%s339] sm:$0x1]
            %v341 = vadd.f32 %v336, %v340
            %s342 = sadd.s32 %s318, 5
            %s343 = sld [smem:[#allocation6 + %s342]]
            %s344 = scalar_lea.vmem [#allocation7], %s343
            %v345 = vld [vmem:[%s344] sm:$0x1]
            %v346 = vadd.f32 %v341, %v345
            %s347 = sadd.s32 %s318, 6
            %s348 = sld [smem:[#allocation6 + %s347]]
            %s349 = scalar_lea.vmem [#allocation7], %s348
            %v350 = vld [vmem:[%s349] sm:$0x1]
            %v351 = vadd.f32 %v346, %v350
            %s352 = sadd.s32 %s318, 7
            %s353 = sld [smem:[#allocation6 + %s352]]
            %s354 = scalar_lea.vmem [#allocation7], %s353
            %v355 = vld [vmem:[%s354] sm:$0x1]
            %v356 = vadd.f32 %v351, %v355
            %v357 = vadd.f32 %v356, %v310
            %v358 = vmax.f32 %v357, 0.0
            %s359 = scalar_lea.vmem [#allocation2], %s317
            %360 = vst [vmem:[%s359] sm:$0x1] %v358
          $region53: #{tpu_custom_call.1} parent=47 // loop_footer
            %s316 = sadd.s32 1, %s312
          $region54: #{tpu_custom_call.1} parent=47 // loop_footer_branch
            %311 = sbr.rel target = $region50
          $region55: #{tpu_custom_call.1} parent=47 // loop_exit
            _
        $region48: #{tpu_custom_call.1} parent=35 // pred_fallthru
          _
        %s361 = scalar_lea.vmem [#allocation2], %s298
        %v362 = vld [vmem:[%s361] sm:$0xff]
        %v363 = vpack.c.bf16 %v362, %v362
        %v364 = vld [vmem:[%s261] sm:$0xf]
        %v365 = vld [vmem:[%s261 + $0x4] sm:$0xf]
        %v366 = vld [vmem:[%s261 + $0x8] sm:$0xf]
        %v367 = vld [vmem:[%s261 + $0xc] sm:$0xf]
        %v368 = vld [vmem:[%s261 + $0x10] sm:$0xf]
        %v369 = vld [vmem:[%s261 + $0x14] sm:$0xf]
        %v370 = vld [vmem:[%s261 + $0x18] sm:$0xf]
        %v371 = vld [vmem:[%s261 + $0x1c] sm:$0xf]
        %v372 = vld [vmem:[%s261 + $0x20] sm:$0xf]
        %v373 = vld [vmem:[%s261 + $0x24] sm:$0xf]
        %v374 = vld [vmem:[%s261 + $0x28] sm:$0xf]
        %v375 = vld [vmem:[%s261 + $0x2c] sm:$0xf]
        %v376 = vld [vmem:[%s261 + $0x30] sm:$0xf]
        %v377 = vld [vmem:[%s261 + $0x34] sm:$0xf]
        %v378 = vld [vmem:[%s261 + $0x38] sm:$0xf]
        %v379 = vld [vmem:[%s261 + $0x3c] sm:$0xf]
        %v380 = vld [vmem:[%s292] sm:$0x1]
        %v382 = vperm.slane %v380, 0
        %v400 = vunpack.c.l.b16 %v364
        %v401 = vunpack.c.l.b16 %v365
        %v402 = vunpack.c.l.b16 %v366
        %v403 = vunpack.c.l.b16 %v367
        %v404 = vunpack.c.l.b16 %v368
        %v405 = vunpack.c.l.b16 %v369
        %v406 = vunpack.c.l.b16 %v370
        %v407 = vunpack.c.l.b16 %v371
        %v408 = vunpack.c.l.b16 %v372
        %v409 = vunpack.c.l.b16 %v373
        %v410 = vunpack.c.l.b16 %v374
        %v411 = vunpack.c.l.b16 %v375
        %v412 = vunpack.c.l.b16 %v376
        %v413 = vunpack.c.l.b16 %v377
        %v414 = vunpack.c.l.b16 %v378
        %v415 = vunpack.c.l.b16 %v379
        %v416 = vpack.c.b16 %v401, %v400
        %v417 = vpack.c.b16 %v403, %v402
        %v418 = vpack.c.b16 %v405, %v404
        %v419 = vpack.c.b16 %v407, %v406
        %v420 = vpack.c.b16 %v409, %v408
        %v421 = vpack.c.b16 %v411, %v410
        %v422 = vpack.c.b16 %v413, %v412
        %v423 = vpack.c.b16 %v415, %v414
        %432 = vmatpush.bf16.msra.mxu0 %v423
        %433 = vmatpush.bf16.msra.mxu0 %v422
        %434 = vmatpush.bf16.msra.mxu0 %v421
        %435 = vmatpush.bf16.msra.mxu0 %v420
        %436 = vmatpush.bf16.msra.mxu0 %v419
        %437 = vmatpush.bf16.msra.mxu0 %v418
        %438 = vmatpush.bf16.msra.mxu0 %v417
        %439 = vmatpush.bf16.msra.mxu0 %v416
        %440 = vmatmul.bf16.gmra.mxu0 %v363
        %v441 = vpop.f32.mrf.mxu0
        %v442 = vadd.f32 %v382, %v441
        %v443 = vpop.f32.mrf.mxu0
        %444 = vdwg.mxu0
        // Predicated region
        $region56: #{tpu_custom_call.1} parent=35 // pred_check
          %p445 = pneg %p299
        $region57: #{tpu_custom_call.1} parent=35 // pred_check_branch
          %447 = sbr.rel (%p445) target = $region59
        $region58: #{tpu_custom_call.1} parent=35 // pred_region
          %s448 = scalar_lea.vmem [#allocation3], %s298
          %v449 = vld [vmem:[%s448] sm:$0xff]
          %450 = vmax.xlane.f32.xlu0 %v442
          %v451 = vpop.xlane.xlu0 %450
          %v452 = vmax.f32 %v449, %v451
          %s453 = scalar_lea.vmem [#allocation4], %s298
          %v454 = vld [vmem:[%s453] sm:$0xff]
          %v455 = vsub.f32 %v449, %v452
          %v456 = vmul.f32 %v455, 1.442695
          %v457 = vpow.pop %v456
          %v458 = vmul.f32 %v454, %v457
          %460 = vset.pattern.permute.xlu0 0
          %461 = vperm.xlu0 %460, %v452
          %v462 = vpop.permute.xlu0 %461
          %v464 = vsub.f32 %v442, %v462
          %v465 = vmul.f32 %v464, 1.442695
          %v466 = vpow.pop %v465
          %467 = vadd.xlane.f32.xlu0 %v466
          %v468 = vpop.xlane.xlu0 %467
          %v469 = vadd.f32 %v458, %v468
          %vm470 = vcmask 7168
          %471 = vst.msk [vmem:[%s453] sm:$0xff] %vm470, %v469
          %472 = vst.msk [vmem:[%s448] sm:$0xff] %vm470, %v452
        $region59: #{tpu_custom_call.1} parent=35 // pred_fallthru
          _
        %p473 = scmp.eq.s32.totalorder %s38, 1
        %p474 = pnand %p473, %p300
        %p475 = pneg %p474
        // Predicated region
        $region60: #{tpu_custom_call.1} parent=35 // pred_check
          _
        $region61: #{tpu_custom_call.1} parent=35 // pred_check_branch
          %477 = sbr.rel (%p474) target = $region63
        $region62: #{tpu_custom_call.1} parent=35 // pred_region
          %s478 = scalar_lea.vmem [#allocation3], %s298
          %v479 = vld [vmem:[%s478] sm:$0xff]
          %s480 = scalar_lea.vmem [#allocation4], %s298
          %v481 = vld [vmem:[%s480] sm:$0xff]
          %v482 = vlog2.pop %v481
          %v483 = vmul.f32 %v482, 0.6931472
          %v484 = vadd.f32 %v479, %v483
          %vm485 = vcmask 7168
          %486 = vst.msk [vmem:[%s478] sm:$0xff] %vm485, %v484
        $region63: #{tpu_custom_call.1} parent=35 // pred_fallthru
          _
        // Predicated region
        $region64: #{tpu_custom_call.1} parent=35 // pred_check
          %p487 = pneg %p473
        $region65: #{tpu_custom_call.1} parent=35 // pred_check_branch
          %489 = sbr.rel (%p487) target = $region67
        $region66: #{tpu_custom_call.1} parent=35 // pred_region
          %s490 = scalar_lea.vmem [#allocation3], %s298
          %v491 = vld [vmem:[%s490] sm:$0xff]
          %493 = vset.pattern.permute.xlu0 0
          %494 = vperm.xlu0 %493, %v491
          %v495 = vpop.permute.xlu0 %494
          %v497 = vsub.f32 %v442, %v495
          %498 = vst [vmem:[%s289] sm:$0xff] %v497
        $region67: #{tpu_custom_call.1} parent=35 // pred_fallthru
          _
        %s499 = sand.u32 %s169, 1
        %s500 = scalar_lea.sflag [#allocation9], %s499
        %s501 = sand.u32 %s169, 1
        %s502 = smul.addr %s501, 8
        %s503 = scalar_lea.vmem [#allocation12], %s502
        // Predicated region
        $region68: #{tpu_custom_call.1} parent=35 // pred_check
          %p504 = pneg %p179
        $region69: #{tpu_custom_call.1} parent=35 // pred_check_branch
          %506 = sbr.rel (%p504) target = $region71
        $region70: #{tpu_custom_call.1} parent=35 // pred_region
          %p507 = scmp.eq.s32.totalorder %s38, 1
          %s508 = scalar_select %p507, %s40, 0
          %s509 = sadd.s32 %s37, %s508
          %s510 = scalar_select %p507, %s39, 0
          %512 = vsyncadd %s500, 0
          %s513 = smul.addr %s509, 2
          %s514 = sadd.s32 %s510, %s513
          %s515 = smul.addr %s514, 8
          %s516 = scalar_lea.hbm %s5, %s515
          %s518 = sshll.u32 %s503, 4
          %s519 = int_to_ptr.vmem [resolvable:$true] %s518
          %s520 = sshll.u32 %s516, 4
          %s521 = int_to_ptr.hbm [resolvable:$true] %s520
          %523 = dma.vmem_to_hbm [thread:$0]  %s519, 128, %s521, %s500
        $region71: #{tpu_custom_call.1} parent=35 // pred_fallthru
          _
      $region36: #{tpu_custom_call.1} parent=5 // pred_fallthru
        _
      %p524 = scmp.le.s32.totalorder 2, %s26
      // Predicated region
      $region72: #{tpu_custom_call.1} parent=5 // pred_check
        %p525 = pneg %p524
      $region73: #{tpu_custom_call.1} parent=5 // pred_check_branch
        %527 = sbr.rel (%p525) target = $region75
      $region74: #{tpu_custom_call.1} parent=5 // pred_region
        %s528 = ssub.s32 %s26, 2
        // Predicated region
        $region76: #{tpu_custom_call.1} parent=74 // pred_check
          %p529 = pneg %p185
        $region77: #{tpu_custom_call.1} parent=74 // pred_check_branch
          %531 = sbr.rel (%p529) target = $region79
        $region78: #{tpu_custom_call.1} parent=74 // pred_region
          %s532 = sand.u32 %s170, 1
          %s533 = scalar_lea.sflag [#allocation9], %s532
          %s534 = sand.u32 %s170, 1
          %s535 = smul.addr %s534, 8
          %s536 = scalar_lea.vmem [#allocation12], %s535
          %538 = dma.done %s533, 128
        $region79: #{tpu_custom_call.1} parent=74 // pred_fallthru
          _
      $region75: #{tpu_custom_call.1} parent=5 // pred_fallthru
        _
    $region6: #{tpu_custom_call.1} parent=1 // loop_footer
      %s30 = sadd.s32 1, %s26
    $region7: #{tpu_custom_call.1} parent=1 // loop_footer_branch
      %25 = sbr.rel target = $region3
    $region8: #{tpu_custom_call.1} parent=1 // loop_exit
      _
    %539 = vsyncpa [#allocation8], 1
    %s540 = scalar_lea.sflag [#allocation8], 1
    %541 = vsyncpa %s540, 1
    %542 = vsyncpa [#allocation11], 1
    %s543 = scalar_lea.sflag [#allocation11], 1
    %544 = vsyncpa %s543, 1
    %545 = vsyncpa [#allocation9], 1
    %s546 = scalar_lea.sflag [#allocation9], 1
    %547 = vsyncpa %s546, 1

</llo_original>
